<compile_context>
chip_gen: v7x
topology: tpu7x:2x2x1
jax: 0.10.0
libtpu: 0.0.40
codegen_flags: <defaults>
</compile_context>

<pallas_src>
import functools

import numpy as np
import jax
import jax.numpy as jnp
from jax.experimental import pallas as pl
from jax.experimental.pallas import tpu as pltpu


def get_padding(kernel_size: int, stride: int = 1, dilation: int = 1) -> int:
    return (stride - 1 + dilation * (kernel_size - 1)) // 2


def _blur_pool_kernel(x_ref, o_ref, xp_ref, tmp_ref, *, coeffs, filt_size,
                      stride, pad, h, w, ho, wo):
    # x_ref  : VMEM (H,  W,  BB)  unpadded input planes, BB fused N*C planes on lanes
    # o_ref  : VMEM (Ho, Wo, BB)  output planes
    # xp_ref : VMEM (Hp, Wp, BB)  f32 scratch: reflect-padded input
    # tmp_ref: VMEM (Ho, Wp, BB)  f32 scratch: vertical-pass result
    x = x_ref[...].astype(jnp.float32)

    # ---- build the reflect-padded plane in VMEM (separable reflect) ----
    xp_ref[pl.ds(pad, h), pl.ds(pad, w), :] = x
    for r in range(pad):                              # top / bottom halo rows
        s = pad - r
        xp_ref[pl.ds(r, 1), pl.ds(pad, w), :] = x[s:s + 1]
        s = h - 2 - r
        xp_ref[pl.ds(pad + h + r, 1), pl.ds(pad, w), :] = x[s:s + 1]
    for c in range(pad):                              # left / right halo cols (corners incl.)
        xp_ref[:, pl.ds(c, 1), :] = xp_ref[:, pl.ds(2 * pad - c, 1), :]
        xp_ref[:, pl.ds(pad + w + c, 1), :] = xp_ref[:, pl.ds(pad + w - 2 - c, 1), :]

    # ---- vertical blur + stride decimation (strided over the outer dim) ----
    acc_v = coeffs[0] * xp_ref[pl.ds(0, ho, stride), :, :]
    for a in range(1, filt_size):
        acc_v = acc_v + coeffs[a] * xp_ref[pl.ds(a, ho, stride), :, :]
    tmp_ref[...] = acc_v

    # ---- horizontal blur + stride decimation (strided over sublanes) ----
    acc_h = coeffs[0] * tmp_ref[:, pl.ds(0, wo, stride), :]
    for b in range(1, filt_size):
        acc_h = acc_h + coeffs[b] * tmp_ref[:, pl.ds(b, wo, stride), :]

    o_ref[...] = acc_h.astype(o_ref.dtype)


def blur_pool_2d(x, *, channels=None, filt_size: int = 3, stride: int = 2,
                 pad_mode: str = "reflect"):
    """Pallas equivalent of BlurPool2d.forward for NCHW input `x`."""
    assert filt_size > 1
    assert pad_mode == "reflect", "only reflect padding is implemented"
    n, c, h, w = x.shape
    if channels is not None:
        assert channels == c, "channels argument must match input channels"

    pad = get_padding(filt_size, stride=stride, dilation=1)
    assert pad < h and pad < w, "reflect padding requires pad < spatial size"
    hp, wp = h + 2 * pad, w + 2 * pad
    ho = (hp - filt_size) // stride + 1
    wo = (wp - filt_size) // stride + 1

    # 1-D binomial coefficients; the module's 2-D filter is their outer product.
    coeffs = tuple(float(v) for v in
                   (np.poly1d((0.5, 0.5)) ** (filt_size - 1)).coeffs.astype(np.float32))

    # Channels-last slab: fused N*C on the lane axis (layout plumbing only).
    b_total = n * c
    x_cl = x.reshape(n * c, h, w).transpose(1, 2, 0)          # (H, W, N*C)

    # Pick the lane-block (planes per grid step) so double-buffered blocks
    # plus scratch fit comfortably in VMEM on all generations (v7x: 64 MiB).
    itemsize = jnp.dtype(x.dtype).itemsize

    def _vmem_bytes(bb):
        in_blk = h * w * bb * itemsize
        out_blk = ho * wo * bb * itemsize
        scratch = (hp * wp + ho * wp) * bb * 4
        return 2 * (in_blk + out_blk) + scratch

    budget = 30 * 1024 * 1024
    if b_total % 128 == 0:
        fitting = [cb for cb in (1024, 512, 256, 128)
                   if b_total % cb == 0 and _vmem_bytes(cb) <= budget]
        bb = fitting[0] if fitting else 128
    else:
        bb = b_total
    # TODO(synk): add H-row tiling with a (filt_size - stride)-row halo for very
    # large images whose (H, W, 128) slab alone would exceed the VMEM budget.

    kernel = functools.partial(
        _blur_pool_kernel, coeffs=coeffs, filt_size=filt_size, stride=stride,
        pad=pad, h=h, w=w, ho=ho, wo=wo)

    grid_spec = pltpu.PrefetchScalarGridSpec(
        num_scalar_prefetch=0,
        grid=(b_total // bb,),
        in_specs=[pl.BlockSpec((h, w, bb), lambda i: (0, 0, i))],
        out_specs=pl.BlockSpec((ho, wo, bb), lambda i: (0, 0, i)),
        scratch_shapes=[pltpu.VMEM((hp, wp, bb), jnp.float32),
                        pltpu.VMEM((ho, wp, bb), jnp.float32)],
    )

    out_cl = pl.pallas_call(
        kernel,
        out_shape=jax.ShapeDtypeStruct((ho, wo, b_total), x.dtype),
        grid_spec=grid_spec,
        compiler_params=pltpu.CompilerParams(
            dimension_semantics=("parallel",),          # shards across v7x's 2 TCs
            vmem_limit_bytes=48 * 1024 * 1024),
    )(x_cl)

    return out_cl.transpose(2, 0, 1).reshape(n, c, ho, wo)


if __name__ == "__main__":
    key = jax.random.PRNGKey(0)
    N, C, H, W = 2, 4, 16, 16
    x = jax.random.normal(key, (N, C, H, W), dtype=jnp.float32)

    out = blur_pool_2d(x, channels=C, filt_size=3, stride=2, pad_mode="reflect")
    out = jax.block_until_ready(out)
    assert out.shape == (N, C, 8, 8), out.shape

    # Reference: depthwise conv2d with the 2-D outer-product blur filter.
    coeffs = (np.poly1d((0.5, 0.5)) ** 2).coeffs.astype(np.float32)
    filt2d = jnp.asarray(np.outer(coeffs, coeffs))
    weight = jnp.broadcast_to(filt2d[None, None], (C, 1, 3, 3))
    x_pad = jnp.pad(x, ((0, 0), (0, 0), (1, 1), (1, 1)), mode="reflect")
    ref = jax.lax.conv_general_dilated(
        x_pad, weight, window_strides=(2, 2), padding="VALID",
        dimension_numbers=("NCHW", "OIHW", "NCHW"), feature_group_count=C)

    assert jnp.allclose(out, ref, atol=1e-5, rtol=1e-5), float(
        jnp.max(jnp.abs(out - ref)))
    print("KERNEL_OK")
</pallas_src>

<mosaic_0001>
module attributes {stable_mosaic.version = 11 : i64} {
  func.func @_blur_pool_kernel(%arg0: i32, %arg1: memref<16x16x8xf32, #tpu.memory_space<vmem>>, %arg2: memref<8x8x8xf32, #tpu.memory_space<vmem>>, %arg3: memref<18x18x8xf32, #tpu.memory_space<vmem>>, %arg4: memref<8x18x8xf32, #tpu.memory_space<vmem>>) attributes {dimension_semantics = [#tpu.dimension_semantics<parallel>], iteration_bounds = array<i64: 1>, scalar_prefetch = 0 : i64, scratch_operands = 2 : i64, tpu.core_type = #tpu.core_type<tc>, window_params = [{transform_indices = @transform_0, window_bounds = array<i64: 16, 16, 8>}, {transform_indices = @transform_1, window_bounds = array<i64: 8, 8, 8>}]} {
    %c0 = arith.constant 0 : index
    %c0_0 = arith.constant 0 : index
    %c0_1 = arith.constant 0 : index
    %0 = vector.load %arg1[%c0, %c0_0, %c0_1] : memref<16x16x8xf32, #tpu.memory_space<vmem>>, vector<16x16x8xf32>
    %c1 = arith.constant 1 : index
    %c1_2 = arith.constant 1 : index
    %c0_3 = arith.constant 0 : index
    %1 = vector.load %arg3[%c1, %c1_2, %c0_3] : memref<18x18x8xf32, #tpu.memory_space<vmem>>, vector<16x16x8xf32>
    tpu.vector_store %arg3[%c1, %c1_2, %c0_3], %0 {strides = array<i32>} : memref<18x18x8xf32, #tpu.memory_space<vmem>>, vector<16x16x8xf32>,
    %2 = vector.extract_strided_slice %0 {offsets = [1, 0, 0], sizes = [1, 16, 8], strides = [1, 1, 1]} : vector<16x16x8xf32> to vector<1x16x8xf32>
    %c0_4 = arith.constant 0 : index
    %c1_5 = arith.constant 1 : index
    %c0_6 = arith.constant 0 : index
    %3 = vector.load %arg3[%c0_4, %c1_5, %c0_6] : memref<18x18x8xf32, #tpu.memory_space<vmem>>, vector<1x16x8xf32>
    tpu.vector_store %arg3[%c0_4, %c1_5, %c0_6], %2 {strides = array<i32>} : memref<18x18x8xf32, #tpu.memory_space<vmem>>, vector<1x16x8xf32>,
    %4 = vector.extract_strided_slice %0 {offsets = [14, 0, 0], sizes = [1, 16, 8], strides = [1, 1, 1]} : vector<16x16x8xf32> to vector<1x16x8xf32>
    %c17 = arith.constant 17 : index
    %c1_7 = arith.constant 1 : index
    %c0_8 = arith.constant 0 : index
    %5 = vector.load %arg3[%c17, %c1_7, %c0_8] : memref<18x18x8xf32, #tpu.memory_space<vmem>>, vector<1x16x8xf32>
    tpu.vector_store %arg3[%c17, %c1_7, %c0_8], %4 {strides = array<i32>} : memref<18x18x8xf32, #tpu.memory_space<vmem>>, vector<1x16x8xf32>,
    %c0_9 = arith.constant 0 : index
    %c2 = arith.constant 2 : index
    %c0_10 = arith.constant 0 : index
    %6 = vector.load %arg3[%c0_9, %c2, %c0_10] : memref<18x18x8xf32, #tpu.memory_space<vmem>>, vector<18x1x8xf32>
    %c0_11 = arith.constant 0 : index
    %c0_12 = arith.constant 0 : index
    %c0_13 = arith.constant 0 : index
    %7 = vector.load %arg3[%c0_11, %c0_12, %c0_13] : memref<18x18x8xf32, #tpu.memory_space<vmem>>, vector<18x1x8xf32>
    tpu.vector_store %arg3[%c0_11, %c0_12, %c0_13], %6 {strides = array<i32>} : memref<18x18x8xf32, #tpu.memory_space<vmem>>, vector<18x1x8xf32>,
    %c0_14 = arith.constant 0 : index
    %c15 = arith.constant 15 : index
    %c0_15 = arith.constant 0 : index
    %8 = vector.load %arg3[%c0_14, %c15, %c0_15] : memref<18x18x8xf32, #tpu.memory_space<vmem>>, vector<18x1x8xf32>
    %c0_16 = arith.constant 0 : index
    %c17_17 = arith.constant 17 : index
    %c0_18 = arith.constant 0 : index
    %9 = vector.load %arg3[%c0_16, %c17_17, %c0_18] : memref<18x18x8xf32, #tpu.memory_space<vmem>>, vector<18x1x8xf32>
    tpu.vector_store %arg3[%c0_16, %c17_17, %c0_18], %8 {strides = array<i32>} : memref<18x18x8xf32, #tpu.memory_space<vmem>>, vector<18x1x8xf32>,
    %c0_19 = arith.constant 0 : index
    %c0_20 = arith.constant 0 : index
    %c0_21 = arith.constant 0 : index
    %10 = tpu.strided_load %arg3[%c0_19, %c0_20, %c0_21] {strides = array<i32: 2, 1, 1>} : memref<18x18x8xf32, #tpu.memory_space<vmem>>, vector<8x18x8xf32>
    %cst = arith.constant 2.500000e-01 : f32
    %11 = vector.broadcast %cst : f32 to vector<8x18x8xf32>
    %12 = arith.mulf %11, %10 : vector<8x18x8xf32>
    %c1_22 = arith.constant 1 : index
    %c0_23 = arith.constant 0 : index
    %c0_24 = arith.constant 0 : index
    %13 = tpu.strided_load %arg3[%c1_22, %c0_23, %c0_24] {strides = array<i32: 2, 1, 1>} : memref<18x18x8xf32, #tpu.memory_space<vmem>>, vector<8x18x8xf32>
    %cst_25 = arith.constant 5.000000e-01 : f32
    %14 = vector.broadcast %cst_25 : f32 to vector<8x18x8xf32>
    %15 = arith.mulf %14, %13 : vector<8x18x8xf32>
    %16 = arith.addf %12, %15 : vector<8x18x8xf32>
    %c2_26 = arith.constant 2 : index
    %c0_27 = arith.constant 0 : index
    %c0_28 = arith.constant 0 : index
    %17 = tpu.strided_load %arg3[%c2_26, %c0_27, %c0_28] {strides = array<i32: 2, 1, 1>} : memref<18x18x8xf32, #tpu.memory_space<vmem>>, vector<8x18x8xf32>
    %cst_29 = arith.constant 2.500000e-01 : f32
    %18 = vector.broadcast %cst_29 : f32 to vector<8x18x8xf32>
    %19 = arith.mulf %18, %17 : vector<8x18x8xf32>
    %20 = arith.addf %16, %19 : vector<8x18x8xf32>
    %c0_30 = arith.constant 0 : index
    %c0_31 = arith.constant 0 : index
    %c0_32 = arith.constant 0 : index
    %21 = vector.load %arg4[%c0_30, %c0_31, %c0_32] : memref<8x18x8xf32, #tpu.memory_space<vmem>>, vector<8x18x8xf32>
    tpu.vector_store %arg4[%c0_30, %c0_31, %c0_32], %20 {strides = array<i32>} : memref<8x18x8xf32, #tpu.memory_space<vmem>>, vector<8x18x8xf32>,
    %c0_33 = arith.constant 0 : index
    %c0_34 = arith.constant 0 : index
    %c0_35 = arith.constant 0 : index
    %22 = tpu.strided_load %arg4[%c0_33, %c0_34, %c0_35] {strides = array<i32: 1, 2, 1>} : memref<8x18x8xf32, #tpu.memory_space<vmem>>, vector<8x8x8xf32>
    %cst_36 = arith.constant 2.500000e-01 : f32
    %23 = vector.broadcast %cst_36 : f32 to vector<8x8x8xf32>
    %24 = arith.mulf %23, %22 : vector<8x8x8xf32>
    %c0_37 = arith.constant 0 : index
    %c1_38 = arith.constant 1 : index
    %c0_39 = arith.constant 0 : index
    %25 = tpu.strided_load %arg4[%c0_37, %c1_38, %c0_39] {strides = array<i32: 1, 2, 1>} : memref<8x18x8xf32, #tpu.memory_space<vmem>>, vector<8x8x8xf32>
    %cst_40 = arith.constant 5.000000e-01 : f32
    %26 = vector.broadcast %cst_40 : f32 to vector<8x8x8xf32>
    %27 = arith.mulf %26, %25 : vector<8x8x8xf32>
    %28 = arith.addf %24, %27 : vector<8x8x8xf32>
    %c0_41 = arith.constant 0 : index
    %c2_42 = arith.constant 2 : index
    %c0_43 = arith.constant 0 : index
    %29 = tpu.strided_load %arg4[%c0_41, %c2_42, %c0_43] {strides = array<i32: 1, 2, 1>} : memref<8x18x8xf32, #tpu.memory_space<vmem>>, vector<8x8x8xf32>
    %cst_44 = arith.constant 2.500000e-01 : f32
    %30 = vector.broadcast %cst_44 : f32 to vector<8x8x8xf32>
    %31 = arith.mulf %30, %29 : vector<8x8x8xf32>
    %32 = arith.addf %28, %31 : vector<8x8x8xf32>
    %c0_45 = arith.constant 0 : index
    %c0_46 = arith.constant 0 : index
    %c0_47 = arith.constant 0 : index
    %33 = vector.load %arg2[%c0_45, %c0_46, %c0_47] : memref<8x8x8xf32, #tpu.memory_space<vmem>>, vector<8x8x8xf32>
    tpu.vector_store %arg2[%c0_45, %c0_46, %c0_47], %32 {strides = array<i32>} : memref<8x8x8xf32, #tpu.memory_space<vmem>>, vector<8x8x8xf32>,
    return
  }
  func.func @transform_0(%arg0: i32) -> (i32, i32, i32) {
    %c0_i32 = arith.constant 0 : i32
    %c0_i32_0 = arith.constant 0 : i32
    %c0_i32_1 = arith.constant 0 : i32
    return %c0_i32, %c0_i32_0, %arg0 : i32, i32, i32
  }
  func.func @transform_1(%arg0: i32) -> (i32, i32, i32) {
    %c0_i32 = arith.constant 0 : i32
    %c0_i32_0 = arith.constant 0 : i32
    %c0_i32_1 = arith.constant 0 : i32
    return %c0_i32, %c0_i32_0, %arg0 : i32, i32, i32
  }
}

</mosaic_0001>

<llo_original>
// kernel: tpu_custom_call.1
$region0: #{tpu_custom_call.1}
  #allocation0 [shape = 'u32[]', space=smem, size = 0x4, offset = 0x4, fixed_abs, tag = 'smem constant byte address 0x4 - core index']
  #allocation1 [shape = 'u32[144,128]{1,0:T(1,128)}', space=vmem, size = 0x12000, scoped, tag = 'internal scratch']
  #allocation2 [shape = 'f32[18,18,8]{2,1,0:T(8,128)}', space=vmem, size = 0x36000, scoped, tag = 'scratch operand']
  #allocation3 [shape = 'f32[8,18,8]{2,1,0:T(8,128)}', space=vmem, size = 0x18000, scoped, tag = 'scratch operand']
  %s0 = inlined_call_operand.vmem [shape: f32[16,16,8], index: 0, kind: input, shape index: {}]
  %s1 = inlined_call_operand.hbm [shape: f32[8,8,8], index: 1, kind: output, shape index: {}]
  %s2 = sld [smem:[#allocation0]]
  $region14: #{tpu_custom_call.1} parent=0
    _
  %s4 = ssub.s32 1, %s2
  %s5 = scalar_select 0, %s4, %s2
  $region1: #{tpu_custom_call.1} parent=0
    #allocation4 [shape = 'u8[32768]{0}', space=vmem, size = 0x8000, scoped, tag = 'output window, operand 0, single buffered']
    #allocation5 [shape = 's32[1]{0}', space=sflag, size = 0x4, scoped, tag = 'scoped memory for tpu_custom_call.1']
    %6 = vsyncpa [#allocation5], 0
    // Predicated region
    $region2: #{tpu_custom_call.1} parent=1 // pred_check
      _
    $region3: #{tpu_custom_call.1} parent=1 // pred_check_branch
      %8 = sbr.rel (0) target = $region5
    $region4: #{tpu_custom_call.1} parent=1 // pred_region
      _
    $region5: #{tpu_custom_call.1} parent=1 // pred_fallthru
      _
    %v9 = vld [vmem:[%s0] sm:$0xff]
    %v10 = vld [vmem:[%s0 + $0x8] sm:$0xff]
    %v11 = vld [vmem:[%s0 + $0x10] sm:$0xff]
    %v12 = vld [vmem:[%s0 + $0x18] sm:$0xff]
    %v13 = vld [vmem:[%s0 + $0x20] sm:$0xff]
    %v14 = vld [vmem:[%s0 + $0x28] sm:$0xff]
    %v15 = vld [vmem:[%s0 + $0x30] sm:$0xff]
    %v16 = vld [vmem:[%s0 + $0x38] sm:$0xff]
    %v17 = vld [vmem:[%s0 + $0x40] sm:$0xff]
    %v18 = vld [vmem:[%s0 + $0x48] sm:$0xff]
    %v19 = vld [vmem:[%s0 + $0x50] sm:$0xff]
    %v20 = vld [vmem:[%s0 + $0x58] sm:$0xff]
    %v21 = vld [vmem:[%s0 + $0x60] sm:$0xff]
    %v22 = vld [vmem:[%s0 + $0x68] sm:$0xff]
    %v23 = vld [vmem:[%s0 + $0x70] sm:$0xff]
    %v24 = vld [vmem:[%s0 + $0x78] sm:$0xff]
    %v25 = vld [vmem:[%s0 + $0x80] sm:$0xff]
    %v26 = vld [vmem:[%s0 + $0x88] sm:$0xff]
    %v27 = vld [vmem:[%s0 + $0x90] sm:$0xff]
    %v28 = vld [vmem:[%s0 + $0x98] sm:$0xff]
    %v29 = vld [vmem:[%s0 + $0xa0] sm:$0xff]
    %v30 = vld [vmem:[%s0 + $0xa8] sm:$0xff]
    %v31 = vld [vmem:[%s0 + $0xb0] sm:$0xff]
    %v32 = vld [vmem:[%s0 + $0xb8] sm:$0xff]
    %v33 = vld [vmem:[%s0 + $0xc0] sm:$0xff]
    %v34 = vld [vmem:[%s0 + $0xc8] sm:$0xff]
    %v35 = vld [vmem:[%s0 + $0xd0] sm:$0xff]
    %v36 = vld [vmem:[%s0 + $0xd8] sm:$0xff]
    %v37 = vld [vmem:[%s0 + $0xe0] sm:$0xff]
    %v38 = vld [vmem:[%s0 + $0xe8] sm:$0xff]
    %v39 = vld [vmem:[%s0 + $0xf0] sm:$0xff]
    %v40 = vld [vmem:[%s0 + $0xf8] sm:$0xff]
    %s41 = scalar_lea.vmem [#allocation2], 24
    %vm42 = vcmask 64512
    %43 = vst.msk [vmem:[%s41 + $0x1] sm:$0xff] %vm42, %v9
    %44 = vst.msk [vmem:[%s41 + $0x9] sm:$0xff] %vm42, %v10
    %45 = vst.msk [vmem:[%s41 + $0x19] sm:$0xff] %vm42, %v11
    %46 = vst.msk [vmem:[%s41 + $0x21] sm:$0xff] %vm42, %v12
    %47 = vst.msk [vmem:[%s41 + $0x31] sm:$0xff] %vm42, %v13
    %48 = vst.msk [vmem:[%s41 + $0x39] sm:$0xff] %vm42, %v14
    %49 = vst.msk [vmem:[%s41 + $0x49] sm:$0xff] %vm42, %v15
    %50 = vst.msk [vmem:[%s41 + $0x51] sm:$0xff] %vm42, %v16
    %51 = vst.msk [vmem:[%s41 + $0x61] sm:$0xff] %vm42, %v17
    %52 = vst.msk [vmem:[%s41 + $0x69] sm:$0xff] %vm42, %v18
    %53 = vst.msk [vmem:[%s41 + $0x79] sm:$0xff] %vm42, %v19
    %54 = vst.msk [vmem:[%s41 + $0x81] sm:$0xff] %vm42, %v20
    %55 = vst.msk [vmem:[%s41 + $0x91] sm:$0xff] %vm42, %v21
    %56 = vst.msk [vmem:[%s41 + $0x99] sm:$0xff] %vm42, %v22
    %57 = vst.msk [vmem:[%s41 + $0xa9] sm:$0xff] %vm42, %v23
    %58 = vst.msk [vmem:[%s41 + $0xb1] sm:$0xff] %vm42, %v24
    %59 = vst.msk [vmem:[%s41 + $0xc1] sm:$0xff] %vm42, %v25
    %60 = vst.msk [vmem:[%s41 + $0xc9] sm:$0xff] %vm42, %v26
    %61 = vst.msk [vmem:[%s41 + $0xd9] sm:$0xff] %vm42, %v27
    %62 = vst.msk [vmem:[%s41 + $0xe1] sm:$0xff] %vm42, %v28
    %63 = vst.msk [vmem:[%s41 + $0xf1] sm:$0xff] %vm42, %v29
    %64 = vst.msk [vmem:[%s41 + $0xf9] sm:$0xff] %vm42, %v30
    %65 = vst.msk [vmem:[%s41 + $0x109] sm:$0xff] %vm42, %v31
    %66 = vst.msk [vmem:[%s41 + $0x111] sm:$0xff] %vm42, %v32
    %67 = vst.msk [vmem:[%s41 + $0x121] sm:$0xff] %vm42, %v33
    %68 = vst.msk [vmem:[%s41 + $0x129] sm:$0xff] %vm42, %v34
    %69 = vst.msk [vmem:[%s41 + $0x139] sm:$0xff] %vm42, %v35
    %70 = vst.msk [vmem:[%s41 + $0x141] sm:$0xff] %vm42, %v36
    %71 = vst.msk [vmem:[%s41 + $0x151] sm:$0xff] %vm42, %v37
    %72 = vst.msk [vmem:[%s41 + $0x159] sm:$0xff] %vm42, %v38
    %73 = vst.msk [vmem:[%s41 + $0x169] sm:$0xff] %vm42, %v39
    %74 = vst.msk [vmem:[%s41 + $0x171] sm:$0xff] %vm42, %v40
    %75 = vst.msk [vmem:[#allocation2 + $0x1] sm:$0xff] %vm42, %v11
    %76 = vst.msk [vmem:[#allocation2 + $0x9] sm:$0xff] %vm42, %v12
    %s77 = scalar_lea.vmem [#allocation2], 408
    %78 = vst.msk [vmem:[%s77 + $0x1] sm:$0xff] %vm42, %v37
    %79 = vst.msk [vmem:[%s77 + $0x9] sm:$0xff] %vm42, %v38
    %v80 = vld [vmem:[#allocation2 + $0x2] sm:$0x1]
    %v81 = vld [vmem:[#allocation2 + $0x1a] sm:$0x1]
    %v82 = vld [vmem:[#allocation2 + $0x32] sm:$0x1]
    %v83 = vld [vmem:[#allocation2 + $0x4a] sm:$0x1]
    %v84 = vld [vmem:[#allocation2 + $0x62] sm:$0x1]
    %v85 = vld [vmem:[#allocation2 + $0x7a] sm:$0x1]
    %v86 = vld [vmem:[#allocation2 + $0x92] sm:$0x1]
    %v87 = vld [vmem:[#allocation2 + $0xaa] sm:$0x1]
    %v88 = vld [vmem:[#allocation2 + $0xc2] sm:$0x1]
    %v89 = vld [vmem:[#allocation2 + $0xda] sm:$0x1]
    %v90 = vld [vmem:[#allocation2 + $0xf2] sm:$0x1]
    %v91 = vld [vmem:[#allocation2 + $0x10a] sm:$0x1]
    %v92 = vld [vmem:[#allocation2 + $0x122] sm:$0x1]
    %v93 = vld [vmem:[#allocation2 + $0x13a] sm:$0x1]
    %v94 = vld [vmem:[#allocation2 + $0x152] sm:$0x1]
    %v95 = vld [vmem:[#allocation2 + $0x16a] sm:$0x1]
    %v96 = vld [vmem:[#allocation2 + $0x182] sm:$0x1]
    %v97 = vld [vmem:[#allocation2 + $0x19a] sm:$0x1]
    %vm98 = vcmask 57344
    %99 = vst.msk [vmem:[#allocation2] sm:$0x1] %vm98, %v80
    %100 = vst.msk [vmem:[#allocation2 + $0x18] sm:$0x1] %vm98, %v81
    %101 = vst.msk [vmem:[#allocation2 + $0x30] sm:$0x1] %vm98, %v82
    %102 = vst.msk [vmem:[#allocation2 + $0x48] sm:$0x1] %vm98, %v83
    %103 = vst.msk [vmem:[#allocation2 + $0x60] sm:$0x1] %vm98, %v84
    %104 = vst.msk [vmem:[#allocation2 + $0x78] sm:$0x1] %vm98, %v85
    %105 = vst.msk [vmem:[#allocation2 + $0x90] sm:$0x1] %vm98, %v86
    %106 = vst.msk [vmem:[#allocation2 + $0xa8] sm:$0x1] %vm98, %v87
    %107 = vst.msk [vmem:[#allocation2 + $0xc0] sm:$0x1] %vm98, %v88
    %108 = vst.msk [vmem:[#allocation2 + $0xd8] sm:$0x1] %vm98, %v89
    %109 = vst.msk [vmem:[#allocation2 + $0xf0] sm:$0x1] %vm98, %v90
    %110 = vst.msk [vmem:[#allocation2 + $0x108] sm:$0x1] %vm98, %v91
    %111 = vst.msk [vmem:[#allocation2 + $0x120] sm:$0x1] %vm98, %v92
    %112 = vst.msk [vmem:[#allocation2 + $0x138] sm:$0x1] %vm98, %v93
    %113 = vst.msk [vmem:[#allocation2 + $0x150] sm:$0x1] %vm98, %v94
    %114 = vst.msk [vmem:[#allocation2 + $0x168] sm:$0x1] %vm98, %v95
    %115 = vst.msk [vmem:[#allocation2 + $0x180] sm:$0x1] %vm98, %v96
    %116 = vst.msk [vmem:[#allocation2 + $0x198] sm:$0x1] %vm98, %v97
    %v117 = vld [vmem:[#allocation2 + $0xf] sm:$0x1]
    %v118 = vld [vmem:[#allocation2 + $0x27] sm:$0x1]
    %v119 = vld [vmem:[#allocation2 + $0x3f] sm:$0x1]
    %v120 = vld [vmem:[#allocation2 + $0x57] sm:$0x1]
    %v121 = vld [vmem:[#allocation2 + $0x6f] sm:$0x1]
    %v122 = vld [vmem:[#allocation2 + $0x87] sm:$0x1]
    %v123 = vld [vmem:[#allocation2 + $0x9f] sm:$0x1]
    %v124 = vld [vmem:[#allocation2 + $0xb7] sm:$0x1]
    %v125 = vld [vmem:[#allocation2 + $0xcf] sm:$0x1]
    %v126 = vld [vmem:[#allocation2 + $0xe7] sm:$0x1]
    %v127 = vld [vmem:[#allocation2 + $0xff] sm:$0x1]
    %v128 = vld [vmem:[#allocation2 + $0x117] sm:$0x1]
    %v129 = vld [vmem:[#allocation2 + $0x12f] sm:$0x1]
    %v130 = vld [vmem:[#allocation2 + $0x147] sm:$0x1]
    %v131 = vld [vmem:[#allocation2 + $0x15f] sm:$0x1]
    %v132 = vld [vmem:[#allocation2 + $0x177] sm:$0x1]
    %v133 = vld [vmem:[#allocation2 + $0x18f] sm:$0x1]
    %v134 = vld [vmem:[#allocation2 + $0x1a7] sm:$0x1]
    %135 = vst.msk [vmem:[#allocation2 + $0x11] sm:$0x1] %vm98, %v117
    %136 = vst.msk [vmem:[#allocation2 + $0x29] sm:$0x1] %vm98, %v118
    %137 = vst.msk [vmem:[#allocation2 + $0x41] sm:$0x1] %vm98, %v119
    %138 = vst.msk [vmem:[#allocation2 + $0x59] sm:$0x1] %vm98, %v120
    %139 = vst.msk [vmem:[#allocation2 + $0x71] sm:$0x1] %vm98, %v121
    %140 = vst.msk [vmem:[#allocation2 + $0x89] sm:$0x1] %vm98, %v122
    %141 = vst.msk [vmem:[#allocation2 + $0xa1] sm:$0x1] %vm98, %v123
    %142 = vst.msk [vmem:[#allocation2 + $0xb9] sm:$0x1] %vm98, %v124
    %143 = vst.msk [vmem:[#allocation2 + $0xd1] sm:$0x1] %vm98, %v125
    %144 = vst.msk [vmem:[#allocation2 + $0xe9] sm:$0x1] %vm98, %v126
    %145 = vst.msk [vmem:[#allocation2 + $0x101] sm:$0x1] %vm98, %v127
    %146 = vst.msk [vmem:[#allocation2 + $0x119] sm:$0x1] %vm98, %v128
    %147 = vst.msk [vmem:[#allocation2 + $0x131] sm:$0x1] %vm98, %v129
    %148 = vst.msk [vmem:[#allocation2 + $0x149] sm:$0x1] %vm98, %v130
    %149 = vst.msk [vmem:[#allocation2 + $0x161] sm:$0x1] %vm98, %v131
    %150 = vst.msk [vmem:[#allocation2 + $0x179] sm:$0x1] %vm98, %v132
    %151 = vst.msk [vmem:[#allocation2 + $0x191] sm:$0x1] %vm98, %v133
    %152 = vst.msk [vmem:[#allocation2 + $0x1a9] sm:$0x1] %vm98, %v134
    %v153 = vld [vmem:[#allocation2] sm:$0xff]
    %v154 = vld [vmem:[#allocation2 + $0x8] sm:$0xff]
    %v155 = vld [vmem:[#allocation2 + $0x10] sm:$0x3]
    %v156 = vld [vmem:[#allocation2 + $0x30] sm:$0xff]
    %v157 = vld [vmem:[#allocation2 + $0x38] sm:$0xff]
    %v158 = vld [vmem:[#allocation2 + $0x40] sm:$0x3]
    %v159 = vld [vmem:[#allocation2 + $0x60] sm:$0xff]
    %v160 = vld [vmem:[#allocation2 + $0x68] sm:$0xff]
    %v161 = vld [vmem:[#allocation2 + $0x70] sm:$0x3]
    %v162 = vld [vmem:[#allocation2 + $0x90] sm:$0xff]
    %v163 = vld [vmem:[#allocation2 + $0x98] sm:$0xff]
    %v164 = vld [vmem:[#allocation2 + $0xa0] sm:$0x3]
    %v165 = vld [vmem:[#allocation2 + $0xc0] sm:$0xff]
    %v166 = vld [vmem:[#allocation2 + $0xc8] sm:$0xff]
    %v167 = vld [vmem:[#allocation2 + $0xd0] sm:$0x3]
    %v168 = vld [vmem:[#allocation2 + $0xf0] sm:$0xff]
    %v169 = vld [vmem:[#allocation2 + $0xf8] sm:$0xff]
    %v170 = vld [vmem:[#allocation2 + $0x100] sm:$0x3]
    %v171 = vld [vmem:[#allocation2 + $0x120] sm:$0xff]
    %v172 = vld [vmem:[#allocation2 + $0x128] sm:$0xff]
    %v173 = vld [vmem:[#allocation2 + $0x130] sm:$0x3]
    %v174 = vld [vmem:[#allocation2 + $0x150] sm:$0xff]
    %v175 = vld [vmem:[#allocation2 + $0x158] sm:$0xff]
    %v176 = vld [vmem:[#allocation2 + $0x160] sm:$0x3]
    %v177 = vmul.f32 %v153, 0.25
    %v178 = vmul.f32 %v154, 0.25
    %v179 = vmul.f32 %v155, 0.25
    %v180 = vmul.f32 %v156, 0.25
    %v181 = vmul.f32 %v157, 0.25
    %v182 = vmul.f32 %v158, 0.25
    %v183 = vmul.f32 %v159, 0.25
    %v184 = vmul.f32 %v160, 0.25
    %v185 = vmul.f32 %v161, 0.25
    %v186 = vmul.f32 %v162, 0.25
    %v187 = vmul.f32 %v163, 0.25
    %v188 = vmul.f32 %v164, 0.25
    %v189 = vmul.f32 %v165, 0.25
    %v190 = vmul.f32 %v166, 0.25
    %v191 = vmul.f32 %v167, 0.25
    %v192 = vmul.f32 %v168, 0.25
    %v193 = vmul.f32 %v169, 0.25
    %v194 = vmul.f32 %v170, 0.25
    %v195 = vmul.f32 %v171, 0.25
    %v196 = vmul.f32 %v172, 0.25
    %v197 = vmul.f32 %v173, 0.25
    %v198 = vmul.f32 %v174, 0.25
    %v199 = vmul.f32 %v175, 0.25
    %v200 = vmul.f32 %v176, 0.25
    %v201 = vld [vmem:[%s41] sm:$0xff]
    %v202 = vld [vmem:[%s41 + $0x8] sm:$0xff]
    %v203 = vld [vmem:[%s41 + $0x10] sm:$0x3]
    %v204 = vld [vmem:[%s41 + $0x30] sm:$0xff]
    %v205 = vld [vmem:[%s41 + $0x38] sm:$0xff]
    %v206 = vld [vmem:[%s41 + $0x40] sm:$0x3]
    %v207 = vld [vmem:[%s41 + $0x60] sm:$0xff]
    %v208 = vld [vmem:[%s41 + $0x68] sm:$0xff]
    %v209 = vld [vmem:[%s41 + $0x70] sm:$0x3]
    %v210 = vld [vmem:[%s41 + $0x90] sm:$0xff]
    %v211 = vld [vmem:[%s41 + $0x98] sm:$0xff]
    %v212 = vld [vmem:[%s41 + $0xa0] sm:$0x3]
    %v213 = vld [vmem:[%s41 + $0xc0] sm:$0xff]
    %v214 = vld [vmem:[%s41 + $0xc8] sm:$0xff]
    %v215 = vld [vmem:[%s41 + $0xd0] sm:$0x3]
    %v216 = vld [vmem:[%s41 + $0xf0] sm:$0xff]
    %v217 = vld [vmem:[%s41 + $0xf8] sm:$0xff]
    %v218 = vld [vmem:[%s41 + $0x100] sm:$0x3]
    %v219 = vld [vmem:[%s41 + $0x120] sm:$0xff]
    %v220 = vld [vmem:[%s41 + $0x128] sm:$0xff]
    %v221 = vld [vmem:[%s41 + $0x130] sm:$0x3]
    %v222 = vld [vmem:[%s41 + $0x150] sm:$0xff]
    %v223 = vld [vmem:[%s41 + $0x158] sm:$0xff]
    %v224 = vld [vmem:[%s41 + $0x160] sm:$0x3]
    %v225 = vmul.f32 %v201, 0.5
    %v226 = vmul.f32 %v202, 0.5
    %v227 = vmul.f32 %v203, 0.5
    %v228 = vmul.f32 %v204, 0.5
    %v229 = vmul.f32 %v205, 0.5
    %v230 = vmul.f32 %v206, 0.5
    %v231 = vmul.f32 %v207, 0.5
    %v232 = vmul.f32 %v208, 0.5
    %v233 = vmul.f32 %v209, 0.5
    %v234 = vmul.f32 %v210, 0.5
    %v235 = vmul.f32 %v211, 0.5
    %v236 = vmul.f32 %v212, 0.5
    %v237 = vmul.f32 %v213, 0.5
    %v238 = vmul.f32 %v214, 0.5
    %v239 = vmul.f32 %v215, 0.5
    %v240 = vmul.f32 %v216, 0.5
    %v241 = vmul.f32 %v217, 0.5
    %v242 = vmul.f32 %v218, 0.5
    %v243 = vmul.f32 %v219, 0.5
    %v244 = vmul.f32 %v220, 0.5
    %v245 = vmul.f32 %v221, 0.5
    %v246 = vmul.f32 %v222, 0.5
    %v247 = vmul.f32 %v223, 0.5
    %v248 = vmul.f32 %v224, 0.5
    %v249 = vadd.f32 %v177, %v225
    %v250 = vadd.f32 %v178, %v226
    %v251 = vadd.f32 %v179, %v227
    %v252 = vadd.f32 %v180, %v228
    %v253 = vadd.f32 %v181, %v229
    %v254 = vadd.f32 %v182, %v230
    %v255 = vadd.f32 %v183, %v231
    %v256 = vadd.f32 %v184, %v232
    %v257 = vadd.f32 %v185, %v233
    %v258 = vadd.f32 %v186, %v234
    %v259 = vadd.f32 %v187, %v235
    %v260 = vadd.f32 %v188, %v236
    %v261 = vadd.f32 %v189, %v237
    %v262 = vadd.f32 %v190, %v238
    %v263 = vadd.f32 %v191, %v239
    %v264 = vadd.f32 %v192, %v240
    %v265 = vadd.f32 %v193, %v241
    %v266 = vadd.f32 %v194, %v242
    %v267 = vadd.f32 %v195, %v243
    %v268 = vadd.f32 %v196, %v244
    %v269 = vadd.f32 %v197, %v245
    %v270 = vadd.f32 %v198, %v246
    %v271 = vadd.f32 %v199, %v247
    %v272 = vadd.f32 %v200, %v248
    %s273 = scalar_lea.vmem [#allocation2], 48
    %v274 = vld [vmem:[%s273] sm:$0xff]
    %v275 = vld [vmem:[%s273 + $0x8] sm:$0xff]
    %v276 = vld [vmem:[%s273 + $0x10] sm:$0x3]
    %v277 = vld [vmem:[%s273 + $0x30] sm:$0xff]
    %v278 = vld [vmem:[%s273 + $0x38] sm:$0xff]
    %v279 = vld [vmem:[%s273 + $0x40] sm:$0x3]
    %v280 = vld [vmem:[%s273 + $0x60] sm:$0xff]
    %v281 = vld [vmem:[%s273 + $0x68] sm:$0xff]
    %v282 = vld [vmem:[%s273 + $0x70] sm:$0x3]
    %v283 = vld [vmem:[%s273 + $0x90] sm:$0xff]
    %v284 = vld [vmem:[%s273 + $0x98] sm:$0xff]
    %v285 = vld [vmem:[%s273 + $0xa0] sm:$0x3]
    %v286 = vld [vmem:[%s273 + $0xc0] sm:$0xff]
    %v287 = vld [vmem:[%s273 + $0xc8] sm:$0xff]
    %v288 = vld [vmem:[%s273 + $0xd0] sm:$0x3]
    %v289 = vld [vmem:[%s273 + $0xf0] sm:$0xff]
    %v290 = vld [vmem:[%s273 + $0xf8] sm:$0xff]
    %v291 = vld [vmem:[%s273 + $0x100] sm:$0x3]
    %v292 = vld [vmem:[%s273 + $0x120] sm:$0xff]
    %v293 = vld [vmem:[%s273 + $0x128] sm:$0xff]
    %v294 = vld [vmem:[%s273 + $0x130] sm:$0x3]
    %v295 = vld [vmem:[%s273 + $0x150] sm:$0xff]
    %v296 = vld [vmem:[%s273 + $0x158] sm:$0xff]
    %v297 = vld [vmem:[%s273 + $0x160] sm:$0x3]
    %v298 = vmul.f32 %v274, 0.25
    %v299 = vmul.f32 %v275, 0.25
    %v300 = vmul.f32 %v276, 0.25
    %v301 = vmul.f32 %v277, 0.25
    %v302 = vmul.f32 %v278, 0.25
    %v303 = vmul.f32 %v279, 0.25
    %v304 = vmul.f32 %v280, 0.25
    %v305 = vmul.f32 %v281, 0.25
    %v306 = vmul.f32 %v282, 0.25
    %v307 = vmul.f32 %v283, 0.25
    %v308 = vmul.f32 %v284, 0.25
    %v309 = vmul.f32 %v285, 0.25
    %v310 = vmul.f32 %v286, 0.25
    %v311 = vmul.f32 %v287, 0.25
    %v312 = vmul.f32 %v288, 0.25
    %v313 = vmul.f32 %v289, 0.25
    %v314 = vmul.f32 %v290, 0.25
    %v315 = vmul.f32 %v291, 0.25
    %v316 = vmul.f32 %v292, 0.25
    %v317 = vmul.f32 %v293, 0.25
    %v318 = vmul.f32 %v294, 0.25
    %v319 = vmul.f32 %v295, 0.25
    %v320 = vmul.f32 %v296, 0.25
    %v321 = vmul.f32 %v297, 0.25
    %v322 = vadd.f32 %v249, %v298
    %v323 = vadd.f32 %v250, %v299
    %v324 = vadd.f32 %v251, %v300
    %v325 = vadd.f32 %v252, %v301
    %v326 = vadd.f32 %v253, %v302
    %v327 = vadd.f32 %v254, %v303
    %v328 = vadd.f32 %v255, %v304
    %v329 = vadd.f32 %v256, %v305
    %v330 = vadd.f32 %v257, %v306
    %v331 = vadd.f32 %v258, %v307
    %v332 = vadd.f32 %v259, %v308
    %v333 = vadd.f32 %v260, %v309
    %v334 = vadd.f32 %v261, %v310
    %v335 = vadd.f32 %v262, %v311
    %v336 = vadd.f32 %v263, %v312
    %v337 = vadd.f32 %v264, %v313
    %v338 = vadd.f32 %v265, %v314
    %v339 = vadd.f32 %v266, %v315
    %v340 = vadd.f32 %v267, %v316
    %v341 = vadd.f32 %v268, %v317
    %v342 = vadd.f32 %v269, %v318
    %v343 = vadd.f32 %v270, %v319
    %v344 = vadd.f32 %v271, %v320
    %v345 = vadd.f32 %v272, %v321
    %346 = vst.msk [vmem:[#allocation3] sm:$0xff] %vm42, %v322
    %347 = vst.msk [vmem:[#allocation3 + $0x8] sm:$0xff] %vm42, %v323
    %vm348 = vcmask 58368
    %349 = vst.msk [vmem:[#allocation3 + $0x10] sm:$0x3] %vm348, %v324
    %350 = vst.msk [vmem:[#allocation3 + $0x18] sm:$0xff] %vm42, %v325
    %351 = vst.msk [vmem:[#allocation3 + $0x20] sm:$0xff] %vm42, %v326
    %352 = vst.msk [vmem:[#allocation3 + $0x28] sm:$0x3] %vm348, %v327
    %353 = vst.msk [vmem:[#allocation3 + $0x30] sm:$0xff] %vm42, %v328
    %354 = vst.msk [vmem:[#allocation3 + $0x38] sm:$0xff] %vm42, %v329
    %355 = vst.msk [vmem:[#allocation3 + $0x40] sm:$0x3] %vm348, %v330
    %356 = vst.msk [vmem:[#allocation3 + $0x48] sm:$0xff] %vm42, %v331
    %357 = vst.msk [vmem:[#allocation3 + $0x50] sm:$0xff] %vm42, %v332
    %358 = vst.msk [vmem:[#allocation3 + $0x58] sm:$0x3] %vm348, %v333
    %359 = vst.msk [vmem:[#allocation3 + $0x60] sm:$0xff] %vm42, %v334
    %360 = vst.msk [vmem:[#allocation3 + $0x68] sm:$0xff] %vm42, %v335
    %361 = vst.msk [vmem:[#allocation3 + $0x70] sm:$0x3] %vm348, %v336
    %362 = vst.msk [vmem:[#allocation3 + $0x78] sm:$0xff] %vm42, %v337
    %363 = vst.msk [vmem:[#allocation3 + $0x80] sm:$0xff] %vm42, %v338
    %364 = vst.msk [vmem:[#allocation3 + $0x88] sm:$0x3] %vm348, %v339
    %365 = vst.msk [vmem:[#allocation3 + $0x90] sm:$0xff] %vm42, %v340
    %366 = vst.msk [vmem:[#allocation3 + $0x98] sm:$0xff] %vm42, %v341
    %367 = vst.msk [vmem:[#allocation3 + $0xa0] sm:$0x3] %vm348, %v342
    %368 = vst.msk [vmem:[#allocation3 + $0xa8] sm:$0xff] %vm42, %v343
    %369 = vst.msk [vmem:[#allocation3 + $0xb0] sm:$0xff] %vm42, %v344
    %370 = vst.msk [vmem:[#allocation3 + $0xb8] sm:$0x3] %vm348, %v345
    %v371 = vld [vmem:[#allocation3] ss:$2 sm:$0xff]
    %s372 = scalar_lea.vmem [#allocation3], 24
    %v373 = vld [vmem:[%s372] ss:$2 sm:$0xff]
    %s374 = scalar_lea.vmem [#allocation3], 48
    %v375 = vld [vmem:[%s374] ss:$2 sm:$0xff]
    %s376 = scalar_lea.vmem [#allocation3], 72
    %v377 = vld [vmem:[%s376] ss:$2 sm:$0xff]
    %s378 = scalar_lea.vmem [#allocation3], 96
    %v379 = vld [vmem:[%s378] ss:$2 sm:$0xff]
    %s380 = scalar_lea.vmem [#allocation3], 120
    %v381 = vld [vmem:[%s380] ss:$2 sm:$0xff]
    %s382 = scalar_lea.vmem [#allocation3], 144
    %v383 = vld [vmem:[%s382] ss:$2 sm:$0xff]
    %s384 = scalar_lea.vmem [#allocation3], 168
    %v385 = vld [vmem:[%s384] ss:$2 sm:$0xff]
    %v386 = vmul.f32 %v371, 0.25
    %v387 = vmul.f32 %v373, 0.25
    %v388 = vmul.f32 %v375, 0.25
    %v389 = vmul.f32 %v377, 0.25
    %v390 = vmul.f32 %v379, 0.25
    %v391 = vmul.f32 %v381, 0.25
    %v392 = vmul.f32 %v383, 0.25
    %v393 = vmul.f32 %v385, 0.25
    %s394 = scalar_lea.vmem [#allocation3], 1
    %v395 = vld [vmem:[%s394] ss:$2 sm:$0xff]
    %s396 = scalar_lea.vmem [#allocation3], 25
    %v397 = vld [vmem:[%s396] ss:$2 sm:$0xff]
    %s398 = scalar_lea.vmem [#allocation3], 49
    %v399 = vld [vmem:[%s398] ss:$2 sm:$0xff]
    %s400 = scalar_lea.vmem [#allocation3], 73
    %v401 = vld [vmem:[%s400] ss:$2 sm:$0xff]
    %s402 = scalar_lea.vmem [#allocation3], 97
    %v403 = vld [vmem:[%s402] ss:$2 sm:$0xff]
    %s404 = scalar_lea.vmem [#allocation3], 121
    %v405 = vld [vmem:[%s404] ss:$2 sm:$0xff]
    %s406 = scalar_lea.vmem [#allocation3], 145
    %v407 = vld [vmem:[%s406] ss:$2 sm:$0xff]
    %s408 = scalar_lea.vmem [#allocation3], 169
    %v409 = vld [vmem:[%s408] ss:$2 sm:$0xff]
    %v410 = vmul.f32 %v395, 0.5
    %v411 = vmul.f32 %v397, 0.5
    %v412 = vmul.f32 %v399, 0.5
    %v413 = vmul.f32 %v401, 0.5
    %v414 = vmul.f32 %v403, 0.5
    %v415 = vmul.f32 %v405, 0.5
    %v416 = vmul.f32 %v407, 0.5
    %v417 = vmul.f32 %v409, 0.5
    %v418 = vadd.f32 %v386, %v410
    %v419 = vadd.f32 %v387, %v411
    %v420 = vadd.f32 %v388, %v412
    %v421 = vadd.f32 %v389, %v413
    %v422 = vadd.f32 %v390, %v414
    %v423 = vadd.f32 %v391, %v415
    %v424 = vadd.f32 %v392, %v416
    %v425 = vadd.f32 %v393, %v417
    %s426 = scalar_lea.vmem [#allocation3], 2
    %v427 = vld [vmem:[%s426] ss:$2 sm:$0xff]
    %s428 = scalar_lea.vmem [#allocation3], 26
    %v429 = vld [vmem:[%s428] ss:$2 sm:$0xff]
    %s430 = scalar_lea.vmem [#allocation3], 50
    %v431 = vld [vmem:[%s430] ss:$2 sm:$0xff]
    %s432 = scalar_lea.vmem [#allocation3], 74
    %v433 = vld [vmem:[%s432] ss:$2 sm:$0xff]
    %s434 = scalar_lea.vmem [#allocation3], 98
    %v435 = vld [vmem:[%s434] ss:$2 sm:$0xff]
    %s436 = scalar_lea.vmem [#allocation3], 122
    %v437 = vld [vmem:[%s436] ss:$2 sm:$0xff]
    %s438 = scalar_lea.vmem [#allocation3], 146
    %v439 = vld [vmem:[%s438] ss:$2 sm:$0xff]
    %s440 = scalar_lea.vmem [#allocation3], 170
    %v441 = vld [vmem:[%s440] ss:$2 sm:$0xff]
    %v442 = vmul.f32 %v427, 0.25
    %v443 = vmul.f32 %v429, 0.25
    %v444 = vmul.f32 %v431, 0.25
    %v445 = vmul.f32 %v433, 0.25
    %v446 = vmul.f32 %v435, 0.25
    %v447 = vmul.f32 %v437, 0.25
    %v448 = vmul.f32 %v439, 0.25
    %v449 = vmul.f32 %v441, 0.25
    %v450 = vadd.f32 %v418, %v442
    %v451 = vadd.f32 %v419, %v443
    %v452 = vadd.f32 %v420, %v444
    %v453 = vadd.f32 %v421, %v445
    %v454 = vadd.f32 %v422, %v446
    %v455 = vadd.f32 %v423, %v447
    %v456 = vadd.f32 %v424, %v448
    %v457 = vadd.f32 %v425, %v449
    %458 = vst.msk [vmem:[#allocation4] sm:$0xff] %vm42, %v450
    %459 = vst.msk [vmem:[#allocation4 + $0x8] sm:$0xff] %vm42, %v451
    %460 = vst.msk [vmem:[#allocation4 + $0x10] sm:$0xff] %vm42, %v452
    %461 = vst.msk [vmem:[#allocation4 + $0x18] sm:$0xff] %vm42, %v453
    %462 = vst.msk [vmem:[#allocation4 + $0x20] sm:$0xff] %vm42, %v454
    %463 = vst.msk [vmem:[#allocation4 + $0x28] sm:$0xff] %vm42, %v455
    %464 = vst.msk [vmem:[#allocation4 + $0x30] sm:$0xff] %vm42, %v456
    %465 = vst.msk [vmem:[#allocation4 + $0x38] sm:$0xff] %vm42, %v457
    // Predicated region
    $region6: #{tpu_custom_call.1} parent=1 // pred_check
      _
    $region7: #{tpu_custom_call.1} parent=1 // pred_check_branch
      %467 = sbr.rel (0) target = $region9
    $region8: #{tpu_custom_call.1} parent=1 // pred_region
      %s469 = ssub.s32 1024, 1024
      %470 = vsyncadd [#allocation5], %s469
      %s471 = sshll.u32 [#allocation4], 4
      %s472 = int_to_ptr.vmem [resolvable:$true] %s471
      %477 = dma.vmem_to_hbm [thread:$0]  %s472, 1024, %s1, [#allocation5], 128, 128, 8
    $region9: #{tpu_custom_call.1} parent=1 // pred_fallthru
      _
    // Predicated region
    $region10: #{tpu_custom_call.1} parent=1 // pred_check
      _
    $region11: #{tpu_custom_call.1} parent=1 // pred_check_branch
      %479 = sbr.rel (0) target = $region13
    $region12: #{tpu_custom_call.1} parent=1 // pred_region
      %480 = dma.done [#allocation5], 1024
    $region13: #{tpu_custom_call.1} parent=1 // pred_fallthru
      _
    %481 = vsyncpa [#allocation5], 1

</llo_original>
